<compile_context>
chip_gen: v6e
topology: v6e:2x2x1
jax: 0.10.0
libtpu: 0.0.40
codegen_flags: <defaults>
</compile_context>

<pallas_src>
import functools

import jax
import jax.numpy as jnp
from jax import lax
from jax.experimental import pallas as pl
from jax.experimental.pallas import tpu as pltpu


def _choose_batch_block(batch, seq_len, target_rows=256):
    """How many batch elements to fuse per grid step.

    Prefer Bb*T >= target_rows (fills the v6e/v7x 256-row MXU and amortizes the
    ~0.35us/step overhead); if the problem is too small for that, prefer an
    even number of grid steps so both v7x TensorCores get equal work.
    """
    divisors = [d for d in range(1, batch + 1) if batch % d == 0]
    for d in divisors:                      # smallest Bb that fills the MXU
        if d * seq_len >= target_rows:
            return d
    even = [d for d in divisors if (batch // d) % 2 == 0]
    return max(even) if even else max(divisors)


def _mhsa_kernel(x_ref, wqkv_ref, o_ref, acc_ref, *,
                 num_heads, channels_head, batch_block, seq_len):
    # x_ref    : (Bb, T, C)        -- Bb batch elements
    # wqkv_ref : (C, 3*H*Dh) bf16  -- fused Q|K|V weights (Q pre-scaled)
    # o_ref    : (Bb, T, H*Dh)     -- concatenated head outputs
    # acc_ref  : (Bb*T, H*Dh) f32  -- VMEM scratch slab for one wide final store
    H, Dh, Bb, T = num_heads, channels_head, batch_block, seq_len
    HD = H * Dh

    # One wide lane-dense projection matmul for all batch rows, heads and Q/K/V.
    x = x_ref[...].reshape(Bb * T, -1).astype(jnp.bfloat16)      # (Bb*T, C)
    qkv = jnp.dot(x, wqkv_ref[...],
                  preferred_element_type=jnp.float32)            # (Bb*T, 3*HD) f32

    # Additive causal mask (hoisted out of the batch/head loops).
    row = lax.broadcasted_iota(jnp.int32, (T, T), 0)   # query index i
    col = lax.broadcasted_iota(jnp.int32, (T, T), 1)   # key index j
    mask = jnp.where(col <= row, jnp.float32(0.0), jnp.float32(-jnp.inf))  # (T,T)

    for b in range(Bb):                                # static, Bb small
        base = b * T
        for h in range(H):                             # static, H small
            q = qkv[base:base + T, h * Dh:(h + 1) * Dh]
            k = qkv[base:base + T, HD + h * Dh:HD + (h + 1) * Dh]
            v = qkv[base:base + T, 2 * HD + h * Dh:2 * HD + (h + 1) * Dh]

            # q @ k^T (scale already folded into Q weights); bf16 MXU operands,
            # f32 accumulation; no explicit transpose materialized.
            scores = lax.dot_general(
                q.astype(jnp.bfloat16), k.astype(jnp.bfloat16),
                (((1,), (1,)), ((), ())),
                preferred_element_type=jnp.float32)              # (Tq, Tk)
            scores = scores + mask

            # softmax over dim=1 of (B, Tq, Tk) == the QUERY axis (axis 0 here).
            # Safe: every key column contains its diagonal, so the max is finite.
            # All softmax arithmetic in f32 (v5e VPU/EUP have no bf16).
            m = jnp.max(scores, axis=0, keepdims=True)           # (1, Tk)
            e = jnp.exp(scores - m)
            p = e * pl.reciprocal(jnp.sum(e, axis=0, keepdims=True), approx=True)

            # Slice-write into the scratch slab: bounds live ranges, no concat.
            acc_ref[base:base + T, h * Dh:(h + 1) * Dh] = jnp.dot(
                p.astype(jnp.bfloat16), v.astype(jnp.bfloat16),
                preferred_element_type=jnp.float32)              # (T, Dh)

    # Single wide store (one vst stream; v5e has only 1 store slot).
    o_ref[...] = acc_ref[...].reshape(Bb, T, HD).astype(o_ref.dtype)


def multi_head_self_attention(x, wq, wk, wv, *, batch_block=None):
    """x: (B, T, C); wq/wk/wv: (H, C, Dh) pre-transposed Linear weights.

    Returns (B, T, H*Dh) == torch.cat([head(x) for head in heads], dim=-1).
    """
    B, T, C = x.shape
    H, _, Dh = wq.shape
    HD = H * Dh

    Bb = _choose_batch_block(B, T) if batch_block is None else batch_block
    assert B % Bb == 0
    grid_steps = B // Bb

    # One-time wrapper-side weight fusion: (H, C, Dh) -> (C, H*Dh); the Q block
    # absorbs the 1/sqrt(Dh) attention scale; whole thing stored in bf16 so the
    # resident weight block (and its DMA) is half-size and MXU-ready.
    def _cat_heads(w):
        return jnp.transpose(w, (1, 0, 2)).reshape(C, HD)
    scale = jnp.float32(Dh) ** jnp.float32(-0.5)
    wqkv = jnp.concatenate(
        [_cat_heads(wq) * scale, _cat_heads(wk), _cat_heads(wv)],
        axis=-1).astype(jnp.bfloat16)                            # (C, 3*H*Dh)

    kernel = functools.partial(_mhsa_kernel, num_heads=H, channels_head=Dh,
                               batch_block=Bb, seq_len=T)

    # Advisory cost estimate so XLA overlaps neighbors with this custom call.
    flops = 2 * B * T * C * 3 * HD + 2 * 2 * B * H * T * T * Dh
    bytes_accessed = (x.size * x.dtype.itemsize
                      + wqkv.size * 2
                      + B * T * HD * x.dtype.itemsize)
    cost = pl.CostEstimate(flops=flops, transcendentals=B * H * T * T,
                           bytes_accessed=bytes_accessed)

    out = pl.pallas_call(
        kernel,
        out_shape=jax.ShapeDtypeStruct((B, T, HD), x.dtype),
        grid_spec=pltpu.PrefetchScalarGridSpec(
            num_scalar_prefetch=0,
            grid=(grid_steps,),
            in_specs=[
                pl.BlockSpec((Bb, T, C), lambda i: (i, 0, 0)),
                # constant block index -> weights DMA'd once, stay resident
                pl.BlockSpec((C, 3 * HD), lambda i: (0, 0)),
            ],
            out_specs=pl.BlockSpec((Bb, T, HD), lambda i: (i, 0, 0)),
            scratch_shapes=[pltpu.VMEM((Bb * T, HD), jnp.float32)],
        ),
        compiler_params=pltpu.CompilerParams(
            dimension_semantics=("parallel",)),
        cost_estimate=cost,
    )(x, wqkv)
    return out


def _reference(x, wq, wk, wv):
    """Pure-JAX f32 reference matching the PyTorch forward exactly."""
    B, T, C = x.shape
    H, _, Dh = wq.shape
    tril = jnp.tril(jnp.ones((T, T), jnp.float32))
    outs = []
    for h in range(H):
        q = x @ wq[h]
        k = x @ wk[h]
        v = x @ wv[h]
        w = q @ jnp.swapaxes(k, -2, -1) * (Dh ** -0.5)
        w = jnp.where(tril == 0, -jnp.inf, w)
        w = jax.nn.softmax(w, axis=1)          # dim=1, as in the reference
        outs.append(w @ v)
    return jnp.concatenate(outs, axis=-1)


if __name__ == "__main__":
    # module hyperparams (small, consistent with the forward)
    block_size = 8           # T
    channels_embedding = 32  # C
    channels_head = 16       # Dh
    number_of_heads = 4      # H
    # dropout_rate = 0.0 (eval) -> identity

    key = jax.random.PRNGKey(0)
    kx, kq, kk, kv = jax.random.split(key, 4)

    batch = 2
    x = jax.random.normal(kx, (batch, block_size, channels_embedding), jnp.float32)
    # deterministic "Linear" weights, stored pre-transposed: (H, C_emb, C_head)
    w_scale = channels_embedding ** -0.5
    wq = jax.random.normal(kq, (number_of_heads, channels_embedding, channels_head), jnp.float32) * w_scale
    wk = jax.random.normal(kk, (number_of_heads, channels_embedding, channels_head), jnp.float32) * w_scale
    wv = jax.random.normal(kv, (number_of_heads, channels_embedding, channels_head), jnp.float32) * w_scale

    out = multi_head_self_attention(x, wq, wk, wv)
    out = jax.block_until_ready(out)

    ref = _reference(x, wq, wk, wv)
    assert out.shape == (batch, block_size, number_of_heads * channels_head), out.shape
    # bf16 MXU operands + approx reciprocal -> loosened tolerance (per review).
    assert jnp.allclose(out, ref, atol=5e-2, rtol=5e-2), float(jnp.max(jnp.abs(out - ref)))

    print("KERNEL_OK")
</pallas_src>

<mosaic_0001>
module attributes {stable_mosaic.version = 11 : i64} {
  func.func @_mhsa_kernel(%arg0: i32, %arg1: memref<1x8x32xf32, #tpu.memory_space<vmem>>, %arg2: memref<32x192xbf16, #tpu.memory_space<vmem>>, %arg3: memref<1x8x64xf32, #tpu.memory_space<vmem>>, %arg4: memref<8x64xf32, #tpu.memory_space<vmem>>) attributes {dimension_semantics = [#tpu.dimension_semantics<parallel>], iteration_bounds = array<i64: 2>, scalar_prefetch = 0 : i64, scratch_operands = 1 : i64, tpu.core_type = #tpu.core_type<tc>, window_params = [{transform_indices = @transform_0, window_bounds = array<i64: 1, 8, 32>}, {pipeline_mode = #tpu.pipeline_mode<synchronous>, transform_indices = @transform_1, window_bounds = array<i64: 32, 192>}, {transform_indices = @transform_2, window_bounds = array<i64: 1, 8, 64>}]} {
    %c0 = arith.constant 0 : index
    %c0_0 = arith.constant 0 : index
    %c0_1 = arith.constant 0 : index
    %0 = vector.load %arg1[%c0, %c0_0, %c0_1] : memref<1x8x32xf32, #tpu.memory_space<vmem>>, vector<1x8x32xf32>
    %1 = vector.shape_cast %0 : vector<1x8x32xf32> to vector<8x32xf32>
    %2 = arith.truncf %1 : vector<8x32xf32> to vector<8x32xbf16>
    %c0_2 = arith.constant 0 : index
    %c0_3 = arith.constant 0 : index
    %3 = vector.load %arg2[%c0_2, %c0_3] : memref<32x192xbf16, #tpu.memory_space<vmem>>, vector<32x192xbf16>
    %cst = arith.constant dense<0.000000e+00> : vector<8x192xf32>
    %4 = tpu.matmul %2, %3, %cst {dimension_numbers = #tpu.dot_dimension_numbers<[1], [0], [0], [1], [0, 0, 1, 1], [], []>} : vector<8x32xbf16>, vector<32x192xbf16>, vector<8x192xf32> -> vector<8x192xf32>
    %5 = tpu.iota {dimensions = array<i32: 0>} : vector<8x8xi32>
    %6 = tpu.iota {dimensions = array<i32: 1>} : vector<8x8xi32>
    %7 = arith.cmpi sle, %6, %5 : vector<8x8xi32>
    %cst_4 = arith.constant 0.000000e+00 : f32
    %cst_5 = arith.constant 0xFF800000 : f32
    %8 = vector.broadcast %cst_4 : f32 to vector<8x8xf32>
    %9 = vector.broadcast %cst_5 : f32 to vector<8x8xf32>
    %10 = arith.select %7, %8, %9 : vector<8x8xi1>, vector<8x8xf32>
    %11 = vector.extract_strided_slice %4 {offsets = [0, 0], sizes = [8, 16], strides = [1, 1]} : vector<8x192xf32> to vector<8x16xf32>
    %12 = vector.extract_strided_slice %4 {offsets = [0, 64], sizes = [8, 16], strides = [1, 1]} : vector<8x192xf32> to vector<8x16xf32>
    %13 = vector.extract_strided_slice %4 {offsets = [0, 128], sizes = [8, 16], strides = [1, 1]} : vector<8x192xf32> to vector<8x16xf32>
    %14 = arith.truncf %11 : vector<8x16xf32> to vector<8x16xbf16>
    %15 = arith.truncf %12 : vector<8x16xf32> to vector<8x16xbf16>
    %cst_6 = arith.constant dense<0.000000e+00> : vector<8x8xf32>
    %16 = tpu.matmul %14, %15, %cst_6 {dimension_numbers = #tpu.dot_dimension_numbers<[1], [1], [0], [0], [0, 0, 1, 0], [], []>} : vector<8x16xbf16>, vector<8x16xbf16>, vector<8x8xf32> -> vector<8x8xf32>
    %17 = arith.addf %16, %10 : vector<8x8xf32>
    %cst_7 = arith.constant dense<0xFF800000> : vector<8xf32>
    %18 = vector.multi_reduction <maximumf>, %17, %cst_7 [0] : vector<8x8xf32> to vector<8xf32>
    %19 = vector.shape_cast %18 : vector<8xf32> to vector<1x8xf32>
    %20 = vector.broadcast %19 : vector<1x8xf32> to vector<8x8xf32>
    %21 = arith.subf %17, %20 : vector<8x8xf32>
    %22 = math.exp %21 : vector<8x8xf32>
    %cst_8 = arith.constant dense<0.000000e+00> : vector<8xf32>
    %23 = vector.multi_reduction <add>, %22, %cst_8 [0] : vector<8x8xf32> to vector<8xf32>
    %24 = vector.shape_cast %23 : vector<8xf32> to vector<1x8xf32>
    %25 = tpu.reciprocal %24 {approx = true} : vector<1x8xf32> -> vector<1x8xf32>
    %26 = vector.broadcast %25 : vector<1x8xf32> to vector<8x8xf32>
    %27 = arith.mulf %22, %26 : vector<8x8xf32>
    %28 = arith.truncf %27 : vector<8x8xf32> to vector<8x8xbf16>
    %29 = arith.truncf %13 : vector<8x16xf32> to vector<8x16xbf16>
    %cst_9 = arith.constant dense<0.000000e+00> : vector<8x16xf32>
    %30 = tpu.matmul %28, %29, %cst_9 {dimension_numbers = #tpu.dot_dimension_numbers<[1], [0], [0], [1], [0, 0, 1, 1], [], []>} : vector<8x8xbf16>, vector<8x16xbf16>, vector<8x16xf32> -> vector<8x16xf32>
    %c0_10 = arith.constant 0 : index
    %c0_11 = arith.constant 0 : index
    %31 = vector.load %arg4[%c0_10, %c0_11] : memref<8x64xf32, #tpu.memory_space<vmem>>, vector<8x16xf32>
    tpu.vector_store %arg4[%c0_10, %c0_11], %30 {strides = array<i32>} : memref<8x64xf32, #tpu.memory_space<vmem>>, vector<8x16xf32>,
    %32 = vector.extract_strided_slice %4 {offsets = [0, 16], sizes = [8, 16], strides = [1, 1]} : vector<8x192xf32> to vector<8x16xf32>
    %33 = vector.extract_strided_slice %4 {offsets = [0, 80], sizes = [8, 16], strides = [1, 1]} : vector<8x192xf32> to vector<8x16xf32>
    %34 = vector.extract_strided_slice %4 {offsets = [0, 144], sizes = [8, 16], strides = [1, 1]} : vector<8x192xf32> to vector<8x16xf32>
    %35 = arith.truncf %32 : vector<8x16xf32> to vector<8x16xbf16>
    %36 = arith.truncf %33 : vector<8x16xf32> to vector<8x16xbf16>
    %cst_12 = arith.constant dense<0.000000e+00> : vector<8x8xf32>
    %37 = tpu.matmul %35, %36, %cst_12 {dimension_numbers = #tpu.dot_dimension_numbers<[1], [1], [0], [0], [0, 0, 1, 0], [], []>} : vector<8x16xbf16>, vector<8x16xbf16>, vector<8x8xf32> -> vector<8x8xf32>
    %38 = arith.addf %37, %10 : vector<8x8xf32>
    %cst_13 = arith.constant dense<0xFF800000> : vector<8xf32>
    %39 = vector.multi_reduction <maximumf>, %38, %cst_13 [0] : vector<8x8xf32> to vector<8xf32>
    %40 = vector.shape_cast %39 : vector<8xf32> to vector<1x8xf32>
    %41 = vector.broadcast %40 : vector<1x8xf32> to vector<8x8xf32>
    %42 = arith.subf %38, %41 : vector<8x8xf32>
    %43 = math.exp %42 : vector<8x8xf32>
    %cst_14 = arith.constant dense<0.000000e+00> : vector<8xf32>
    %44 = vector.multi_reduction <add>, %43, %cst_14 [0] : vector<8x8xf32> to vector<8xf32>
    %45 = vector.shape_cast %44 : vector<8xf32> to vector<1x8xf32>
    %46 = tpu.reciprocal %45 {approx = true} : vector<1x8xf32> -> vector<1x8xf32>
    %47 = vector.broadcast %46 : vector<1x8xf32> to vector<8x8xf32>
    %48 = arith.mulf %43, %47 : vector<8x8xf32>
    %49 = arith.truncf %48 : vector<8x8xf32> to vector<8x8xbf16>
    %50 = arith.truncf %34 : vector<8x16xf32> to vector<8x16xbf16>
    %cst_15 = arith.constant dense<0.000000e+00> : vector<8x16xf32>
    %51 = tpu.matmul %49, %50, %cst_15 {dimension_numbers = #tpu.dot_dimension_numbers<[1], [0], [0], [1], [0, 0, 1, 1], [], []>} : vector<8x8xbf16>, vector<8x16xbf16>, vector<8x16xf32> -> vector<8x16xf32>
    %c0_16 = arith.constant 0 : index
    %c16 = arith.constant 16 : index
    %52 = vector.load %arg4[%c0_16, %c16] : memref<8x64xf32, #tpu.memory_space<vmem>>, vector<8x16xf32>
    tpu.vector_store %arg4[%c0_16, %c16], %51 {strides = array<i32>} : memref<8x64xf32, #tpu.memory_space<vmem>>, vector<8x16xf32>,
    %53 = vector.extract_strided_slice %4 {offsets = [0, 32], sizes = [8, 16], strides = [1, 1]} : vector<8x192xf32> to vector<8x16xf32>
    %54 = vector.extract_strided_slice %4 {offsets = [0, 96], sizes = [8, 16], strides = [1, 1]} : vector<8x192xf32> to vector<8x16xf32>
    %55 = vector.extract_strided_slice %4 {offsets = [0, 160], sizes = [8, 16], strides = [1, 1]} : vector<8x192xf32> to vector<8x16xf32>
    %56 = arith.truncf %53 : vector<8x16xf32> to vector<8x16xbf16>
    %57 = arith.truncf %54 : vector<8x16xf32> to vector<8x16xbf16>
    %cst_17 = arith.constant dense<0.000000e+00> : vector<8x8xf32>
    %58 = tpu.matmul %56, %57, %cst_17 {dimension_numbers = #tpu.dot_dimension_numbers<[1], [1], [0], [0], [0, 0, 1, 0], [], []>} : vector<8x16xbf16>, vector<8x16xbf16>, vector<8x8xf32> -> vector<8x8xf32>
    %59 = arith.addf %58, %10 : vector<8x8xf32>
    %cst_18 = arith.constant dense<0xFF800000> : vector<8xf32>
    %60 = vector.multi_reduction <maximumf>, %59, %cst_18 [0] : vector<8x8xf32> to vector<8xf32>
    %61 = vector.shape_cast %60 : vector<8xf32> to vector<1x8xf32>
    %62 = vector.broadcast %61 : vector<1x8xf32> to vector<8x8xf32>
    %63 = arith.subf %59, %62 : vector<8x8xf32>
    %64 = math.exp %63 : vector<8x8xf32>
    %cst_19 = arith.constant dense<0.000000e+00> : vector<8xf32>
    %65 = vector.multi_reduction <add>, %64, %cst_19 [0] : vector<8x8xf32> to vector<8xf32>
    %66 = vector.shape_cast %65 : vector<8xf32> to vector<1x8xf32>
    %67 = tpu.reciprocal %66 {approx = true} : vector<1x8xf32> -> vector<1x8xf32>
    %68 = vector.broadcast %67 : vector<1x8xf32> to vector<8x8xf32>
    %69 = arith.mulf %64, %68 : vector<8x8xf32>
    %70 = arith.truncf %69 : vector<8x8xf32> to vector<8x8xbf16>
    %71 = arith.truncf %55 : vector<8x16xf32> to vector<8x16xbf16>
    %cst_20 = arith.constant dense<0.000000e+00> : vector<8x16xf32>
    %72 = tpu.matmul %70, %71, %cst_20 {dimension_numbers = #tpu.dot_dimension_numbers<[1], [0], [0], [1], [0, 0, 1, 1], [], []>} : vector<8x8xbf16>, vector<8x16xbf16>, vector<8x16xf32> -> vector<8x16xf32>
    %c0_21 = arith.constant 0 : index
    %c32 = arith.constant 32 : index
    %73 = vector.load %arg4[%c0_21, %c32] : memref<8x64xf32, #tpu.memory_space<vmem>>, vector<8x16xf32>
    tpu.vector_store %arg4[%c0_21, %c32], %72 {strides = array<i32>} : memref<8x64xf32, #tpu.memory_space<vmem>>, vector<8x16xf32>,
    %74 = vector.extract_strided_slice %4 {offsets = [0, 48], sizes = [8, 16], strides = [1, 1]} : vector<8x192xf32> to vector<8x16xf32>
    %75 = vector.extract_strided_slice %4 {offsets = [0, 112], sizes = [8, 16], strides = [1, 1]} : vector<8x192xf32> to vector<8x16xf32>
    %76 = vector.extract_strided_slice %4 {offsets = [0, 176], sizes = [8, 16], strides = [1, 1]} : vector<8x192xf32> to vector<8x16xf32>
    %77 = arith.truncf %74 : vector<8x16xf32> to vector<8x16xbf16>
    %78 = arith.truncf %75 : vector<8x16xf32> to vector<8x16xbf16>
    %cst_22 = arith.constant dense<0.000000e+00> : vector<8x8xf32>
    %79 = tpu.matmul %77, %78, %cst_22 {dimension_numbers = #tpu.dot_dimension_numbers<[1], [1], [0], [0], [0, 0, 1, 0], [], []>} : vector<8x16xbf16>, vector<8x16xbf16>, vector<8x8xf32> -> vector<8x8xf32>
    %80 = arith.addf %79, %10 : vector<8x8xf32>
    %cst_23 = arith.constant dense<0xFF800000> : vector<8xf32>
    %81 = vector.multi_reduction <maximumf>, %80, %cst_23 [0] : vector<8x8xf32> to vector<8xf32>
    %82 = vector.shape_cast %81 : vector<8xf32> to vector<1x8xf32>
    %83 = vector.broadcast %82 : vector<1x8xf32> to vector<8x8xf32>
    %84 = arith.subf %80, %83 : vector<8x8xf32>
    %85 = math.exp %84 : vector<8x8xf32>
    %cst_24 = arith.constant dense<0.000000e+00> : vector<8xf32>
    %86 = vector.multi_reduction <add>, %85, %cst_24 [0] : vector<8x8xf32> to vector<8xf32>
    %87 = vector.shape_cast %86 : vector<8xf32> to vector<1x8xf32>
    %88 = tpu.reciprocal %87 {approx = true} : vector<1x8xf32> -> vector<1x8xf32>
    %89 = vector.broadcast %88 : vector<1x8xf32> to vector<8x8xf32>
    %90 = arith.mulf %85, %89 : vector<8x8xf32>
    %91 = arith.truncf %90 : vector<8x8xf32> to vector<8x8xbf16>
    %92 = arith.truncf %76 : vector<8x16xf32> to vector<8x16xbf16>
    %cst_25 = arith.constant dense<0.000000e+00> : vector<8x16xf32>
    %93 = tpu.matmul %91, %92, %cst_25 {dimension_numbers = #tpu.dot_dimension_numbers<[1], [0], [0], [1], [0, 0, 1, 1], [], []>} : vector<8x8xbf16>, vector<8x16xbf16>, vector<8x16xf32> -> vector<8x16xf32>
    %c0_26 = arith.constant 0 : index
    %c48 = arith.constant 48 : index
    %94 = vector.load %arg4[%c0_26, %c48] : memref<8x64xf32, #tpu.memory_space<vmem>>, vector<8x16xf32>
    tpu.vector_store %arg4[%c0_26, %c48], %93 {strides = array<i32>} : memref<8x64xf32, #tpu.memory_space<vmem>>, vector<8x16xf32>,
    %c0_27 = arith.constant 0 : index
    %c0_28 = arith.constant 0 : index
    %95 = vector.load %arg4[%c0_27, %c0_28] : memref<8x64xf32, #tpu.memory_space<vmem>>, vector<8x64xf32>
    %96 = vector.shape_cast %95 : vector<8x64xf32> to vector<1x8x64xf32>
    %c0_29 = arith.constant 0 : index
    %c0_30 = arith.constant 0 : index
    %c0_31 = arith.constant 0 : index
    %97 = vector.load %arg3[%c0_29, %c0_30, %c0_31] : memref<1x8x64xf32, #tpu.memory_space<vmem>>, vector<1x8x64xf32>
    tpu.vector_store %arg3[%c0_29, %c0_30, %c0_31], %96 {strides = array<i32>} : memref<1x8x64xf32, #tpu.memory_space<vmem>>, vector<1x8x64xf32>,
    return
  }
  func.func @transform_0(%arg0: i32) -> (i32, i32, i32) {
    %c0_i32 = arith.constant 0 : i32
    %c0_i32_0 = arith.constant 0 : i32
    %c0_i32_1 = arith.constant 0 : i32
    return %arg0, %c0_i32, %c0_i32_0 : i32, i32, i32
  }
  func.func @transform_1(%arg0: i32) -> (i32, i32) {
    %c0_i32 = arith.constant 0 : i32
    %c0_i32_0 = arith.constant 0 : i32
    %c0_i32_1 = arith.constant 0 : i32
    return %c0_i32, %c0_i32_0 : i32, i32
  }
  func.func @transform_2(%arg0: i32) -> (i32, i32, i32) {
    %c0_i32 = arith.constant 0 : i32
    %c0_i32_0 = arith.constant 0 : i32
    %c0_i32_1 = arith.constant 0 : i32
    return %arg0, %c0_i32, %c0_i32_0 : i32, i32, i32
  }
}

</mosaic_0001>

<llo_original>
// kernel: tpu_custom_call.1
$region0: #{tpu_custom_call.1}
  #allocation0 [shape = 'u32[]', space=smem, size = 0x4, offset = 0x4, fixed_abs, tag = 'smem constant byte address 0x4 - core index']
  #allocation1 [shape = 'u32[144,128]{1,0:T(1,128)}', space=vmem, size = 0x12000, scoped, tag = 'internal scratch']
  #allocation2 [shape = 'f32[8,64]{1,0:T(8,128)}', space=vmem, size = 0x1000, scoped, tag = 'scratch operand']
  %s0 = inlined_call_operand.hbm [shape: f32[2,8,32], index: 0, kind: input, shape index: {}]
  %s1 = inlined_call_operand.hbm [shape: bf16[32,192], index: 1, kind: input, shape index: {}]
  %s2 = inlined_call_operand.hbm [shape: f32[2,8,64], index: 2, kind: output, shape index: {}]
  %s3 = sld [smem:[#allocation0]]
  $region49: #{tpu_custom_call.1} parent=0
    _
  %s5 = ssub.s32 1, %s3
  %s6 = scalar_select 0, %s5, %s3
  $region1: #{tpu_custom_call.1} parent=0
    #allocation3 [shape = 'u8[8192]{0}', space=vmem, size = 0x2000, scoped, tag = 'input window, operand 0']
    #allocation4 [shape = 's32[2]{0}', space=sflag, size = 0x8, scoped, tag = 'scoped memory for tpu_custom_call.1']
    #allocation5 [shape = 's32[2]{0}', space=sflag, size = 0x8, scoped, tag = 'scoped memory for tpu_custom_call.1']
    #allocation6 [shape = 'u8[16384]{0}', space=vmem, size = 0x4000, scoped, tag = 'input window, operand 1, single buffered']
    #allocation7 [shape = 's32[1]{0}', space=sflag, size = 0x4, scoped, tag = 'scoped memory for tpu_custom_call.1']
    #allocation8 [shape = 'u8[8192]{0}', space=vmem, size = 0x2000, scoped, tag = 'output window, operand 0']
    %7 = vsyncpa [#allocation4], 0
    %s8 = scalar_lea.sflag [#allocation4], 1
    %9 = vsyncpa %s8, 0
    %10 = vsyncpa [#allocation7], 0
    %11 = vsyncpa [#allocation5], 0
    %s12 = scalar_lea.sflag [#allocation5], 1
    %13 = vsyncpa %s12, 0
    loop: start=0, step=1, limit=4
    $region2: #{tpu_custom_call.1} parent=1 // loop_pre_header
      _
    $region3: #{tpu_custom_call.1} parent=1 // loop_header
      %s15 = sphi 0, %s19
      %p16 = scmp.ge.s32.totalorder %s15, 4
      %s25 = sphi 0, %s27
      %s28 = sphi 0, %s25
      %s29 = sphi 0, %s28
      %s45 = sphi 0, %s29
      %s49 = sphi 0, %s49
      %s51 = sphi 0, %s49
      %s52 = sphi 0, %s51
      %s66 = sphi 0, %s52
      %s72 = sphi 0, %s74
      %s75 = sphi 0, %s72
      %s76 = sphi 0, %s75
      %s92 = sphi 0, %s76
    $region4: #{tpu_custom_call.1} parent=1 // loop_header_branch
      %18 = sbr.rel (%p16) target = $region8
    $region5: #{tpu_custom_call.1} parent=1 // loop_body
      %s20 = ssub.s32 %s15, 1
      %s21 = ssub.s32 %s15, 2
      %s22 = sadd.s32 %s15, 1
      %s23 = ssub.s32 %s15, %s22
      %p24 = scmp.eq.s32.totalorder %s23, 0
      %s26 = sadd.s32 %s25, 1
      %s27 = scalar_select %p24, %s25, %s26
      %p30 = pneg %p24
      %p31 = scmp.eq.s32.totalorder %s15, 1
      %p32 = por %p30, %p31
      %p33 = scmp.ne.s32.totalorder %s25, %s28
      %p34 = scmp.eq.s32.totalorder %s15, 0
      %p35 = por %p33, %p34
      %p36 = scmp.ne.s32.totalorder %s25, %s28
      %p37 = scmp.eq.s32.totalorder %s20, 1
      %p38 = por %p36, %p37
      %p39 = scmp.ne.s32.totalorder %s28, %s29
      %p40 = scmp.eq.s32.totalorder %s20, 0
      %p41 = por %p39, %p40
      %p42 = scmp.ne.s32.totalorder %s28, %s29
      %p43 = scmp.eq.s32.totalorder %s21, 1
      %p44 = por %p42, %p43
      %p46 = scmp.ne.s32.totalorder %s29, %s45
      %p47 = scmp.eq.s32.totalorder %s21, 0
      %p48 = por %p46, %p47
      %s50 = sadd.s32 %s49, 1
      %p53 = scmp.eq.s32.totalorder %s15, 1
      %p54 = scmp.ne.s32.totalorder %s49, %s51
      %p55 = scmp.eq.s32.totalorder %s15, 0
      %p56 = por %p54, %p55
      %p57 = scmp.ne.s32.totalorder %s49, %s51
      %p58 = scmp.eq.s32.totalorder %s20, 1
      %p59 = por %p57, %p58
      %p60 = scmp.ne.s32.totalorder %s51, %s52
      %p61 = scmp.eq.s32.totalorder %s20, 0
      %p62 = por %p60, %p61
      %p63 = scmp.ne.s32.totalorder %s51, %s52
      %p64 = scmp.eq.s32.totalorder %s21, 1
      %p65 = por %p63, %p64
      %p67 = scmp.ne.s32.totalorder %s52, %s66
      %p68 = scmp.eq.s32.totalorder %s21, 0
      %p69 = por %p67, %p68
      %s70 = ssub.s32 %s15, %s22
      %p71 = scmp.eq.s32.totalorder %s70, 0
      %s73 = sadd.s32 %s72, 1
      %s74 = scalar_select %p71, %s72, %s73
      %p77 = pneg %p71
      %p78 = scmp.eq.s32.totalorder %s15, 1
      %p79 = por %p77, %p78
      %p80 = scmp.ne.s32.totalorder %s72, %s75
      %p81 = scmp.eq.s32.totalorder %s15, 0
      %p82 = por %p80, %p81
      %p83 = scmp.ne.s32.totalorder %s72, %s75
      %p84 = scmp.eq.s32.totalorder %s20, 1
      %p85 = por %p83, %p84
      %p86 = scmp.ne.s32.totalorder %s75, %s76
      %p87 = scmp.eq.s32.totalorder %s20, 0
      %p88 = por %p86, %p87
      %p89 = scmp.ne.s32.totalorder %s75, %s76
      %p90 = scmp.eq.s32.totalorder %s21, 1
      %p91 = por %p89, %p90
      %p93 = scmp.ne.s32.totalorder %s76, %s92
      %p94 = scmp.eq.s32.totalorder %s21, 0
      %p95 = por %p93, %p94
      %p96 = scmp.le.s32.totalorder 1, %s15
      %p97 = scmp.lt.s32.totalorder %s15, 3
      %p98 = pnand %p96, %p97
      %p99 = pneg %p98
      // Predicated region
      $region9: #{tpu_custom_call.1} parent=5 // pred_check
        _
      $region10: #{tpu_custom_call.1} parent=5 // pred_check_branch
        %101 = sbr.rel (%p98) target = $region12
      $region11: #{tpu_custom_call.1} parent=5 // pred_region
        %s102 = ssub.s32 %s15, 1
        // Predicated region
        $region13: #{tpu_custom_call.1} parent=11 // pred_check
          %p103 = pneg %p62
        $region14: #{tpu_custom_call.1} parent=11 // pred_check_branch
          %105 = sbr.rel (%p103) target = $region16
        $region15: #{tpu_custom_call.1} parent=11 // pred_region
          %s107 = ssub.s32 512, 512
          %108 = vsyncadd [#allocation7], %s107
          %s109 = sshll.u32 [#allocation6], 4
          %s110 = int_to_ptr.vmem [resolvable:$true] %s109
          %115 = dma.hbm_to_vmem [thread:$0]  %s1, 512, %s110, [#allocation7], 128, 128, 8
        $region16: #{tpu_custom_call.1} parent=11 // pred_fallthru
          _
      $region12: #{tpu_custom_call.1} parent=5 // pred_fallthru
        _
      %p116 = scmp.lt.s32.totalorder %s15, 2
      // Predicated region
      $region17: #{tpu_custom_call.1} parent=5 // pred_check
        %p117 = pneg %p116
      $region18: #{tpu_custom_call.1} parent=5 // pred_check_branch
        %119 = sbr.rel (%p117) target = $region20
      $region19: #{tpu_custom_call.1} parent=5 // pred_region
        // Predicated region
        $region21: #{tpu_custom_call.1} parent=19 // pred_check
          %p120 = pneg %p35
        $region22: #{tpu_custom_call.1} parent=19 // pred_check_branch
          %122 = sbr.rel (%p120) target = $region24
        $region23: #{tpu_custom_call.1} parent=19 // pred_region
          %s123 = sand.u32 %s25, 1
          %s124 = scalar_lea.sflag [#allocation4], %s123
          %s125 = sand.u32 %s25, 1
          %s126 = smul.addr %s125, 8
          %s127 = scalar_lea.vmem [#allocation3], %s126
          %s129 = ssub.s32 128, 128
          %130 = vsyncadd %s124, %s129
          %s131 = smul.addr %s15, 128
          %s132 = scalar_lea.hbm %s0, %s131
          %s134 = sshll.u32 %s127, 4
          %s135 = int_to_ptr.vmem [resolvable:$true] %s134
          %137 = dma.hbm_to_vmem [thread:$0]  %s132, 128, %s135, %s124
        $region24: #{tpu_custom_call.1} parent=19 // pred_fallthru
          _
      $region20: #{tpu_custom_call.1} parent=5 // pred_fallthru
        _
      %p138 = scmp.le.s32.totalorder 1, %s15
      %p139 = scmp.lt.s32.totalorder %s15, 3
      %p140 = pnand %p138, %p139
      %p141 = pneg %p140
      // Predicated region
      $region25: #{tpu_custom_call.1} parent=5 // pred_check
        _
      $region26: #{tpu_custom_call.1} parent=5 // pred_check_branch
        %143 = sbr.rel (%p140) target = $region28
      $region27: #{tpu_custom_call.1} parent=5 // pred_region
        %s144 = ssub.s32 %s15, 1
        %s145 = sand.u32 %s28, 1
        %s146 = scalar_lea.sflag [#allocation4], %s145
        %s147 = sand.u32 %s28, 1
        %s148 = smul.addr %s147, 8
        %s149 = scalar_lea.vmem [#allocation3], %s148
        // Predicated region
        $region29: #{tpu_custom_call.1} parent=27 // pred_check
          %p150 = pneg %p41
        $region30: #{tpu_custom_call.1} parent=27 // pred_check_branch
          %152 = sbr.rel (%p150) target = $region32
        $region31: #{tpu_custom_call.1} parent=27 // pred_region
          %153 = dma.done %s146, 128
        $region32: #{tpu_custom_call.1} parent=27 // pred_fallthru
          _
        // Predicated region
        $region33: #{tpu_custom_call.1} parent=27 // pred_check
          %p154 = pneg %p62
        $region34: #{tpu_custom_call.1} parent=27 // pred_check_branch
          %156 = sbr.rel (%p154) target = $region36
        $region35: #{tpu_custom_call.1} parent=27 // pred_region
          %157 = dma.done [#allocation7], 512
        $region36: #{tpu_custom_call.1} parent=27 // pred_fallthru
          _
        %s158 = sand.u32 %s28, 1
        %s159 = scalar_lea.sflag [#allocation4], %s158
        %s160 = sand.u32 %s28, 1
        %s161 = smul.addr %s160, 8
        %s162 = scalar_lea.vmem [#allocation3], %s161
        %p163 = pneg %p41
        %p164 = pneg %p38
        %p165 = pneg %p62
        %p166 = pneg %p59
        %p167 = pneg %p88
        %p168 = pneg %p85
        %s169 = sand.u32 %s75, 1
        %s170 = scalar_lea.sflag [#allocation5], %s169
        %s171 = sand.u32 %s75, 1
        %s172 = smul.addr %s171, 8
        %s173 = scalar_lea.vmem [#allocation8], %s172
        %v175 = vld [vmem:[%s149] sm:$0xff]
        %v176 = vpack.c.bf16 %v175, %v175
        %v177 = vld [vmem:[#allocation6] sm:$0xff]
        %v178 = vld [vmem:[#allocation6 + $0x8] sm:$0xff]
        %v179 = vld [vmem:[#allocation6 + $0x10] sm:$0xff]
        %v180 = vld [vmem:[#allocation6 + $0x18] sm:$0xff]
        %v185 = vunpack.c.l.b16 %v177
        %v186 = vunpack.c.h.b16 %v177
        %v187 = vunpack.c.l.b16 %v178
        %v188 = vunpack.c.h.b16 %v178
        %v189 = vunpack.c.l.b16 %v179
        %v190 = vunpack.c.h.b16 %v179
        %v191 = vunpack.c.l.b16 %v180
        %v192 = vunpack.c.h.b16 %v180
        %v193 = vpack.c.b16 %v187, %v185
        %v194 = vpack.c.b16 %v188, %v186
        %v195 = vpack.c.b16 %v191, %v189
        %v196 = vpack.c.b16 %v192, %v190
        %vm201 = vcmask 261120
        %v203 = vsel %vm201, %v176, 0
        %205 = vmatprep.subr.bf16.mxu0 0
        %206 = vmatpush1.bf16.msra.mxu0 0
        %207 = vmatprep.subr.bf16.mxu0 0
        %208 = vmatpush1.bf16.msra.mxu0 0
        %209 = vmatprep.subr.bf16.mxu0 0
        %210 = vmatpush1.bf16.msra.mxu0 0
        %211 = vmatprep.subr.bf16.mxu0 0
        %212 = vmatpush1.bf16.msra.mxu0 0
        %213 = vmatprep.subr.bf16.mxu0 0
        %214 = vmatpush1.bf16.msra.mxu0 0
        %215 = vmatprep.subr.bf16.mxu0 0
        %216 = vmatpush1.bf16.msra.mxu0 0
        %217 = vmatprep.subr.bf16.mxu0 %v196
        %218 = vmatpush1.bf16.msra.mxu0 %v195
        %219 = vmatprep.subr.bf16.mxu0 %v194
        %220 = vmatpush1.bf16.msra.mxu0 %v193
        %221 = vmatprep.subr.bf16.mxu0 0
        %222 = vmatpush2.bf16.msra.mxu0 0
        %223 = vmatprep.subr.bf16.mxu0 0
        %224 = vmatpush2.bf16.msra.mxu0 0
        %225 = vmatprep.subr.bf16.mxu0 0
        %226 = vmatpush2.bf16.msra.mxu0 0
        %227 = vmatprep.subr.bf16.mxu0 0
        %228 = vmatpush2.bf16.msra.mxu0 0
        %229 = vmatprep.subr.bf16.mxu0 0
        %230 = vmatpush2.bf16.msra.mxu0 0
        %231 = vmatprep.subr.bf16.mxu0 0
        %232 = vmatpush2.bf16.msra.mxu0 0
        %233 = vmatprep.subr.bf16.mxu0 0
        %234 = vmatpush2.bf16.msra.mxu0 0
        %235 = vmatprep.subr.bf16.mxu0 0
        %236 = vmatpush2.bf16.msra.mxu0 0
        %237 = vmatprep.mubr.bf16.mxu0 0
        %238 = vmatmul.mubr.bf16.gmra.mxu0 %v203
        %v239 = vpop.f32.mrf.mxu0
        %v240 = vadd.f32 0.0, %v239
        %v241 = vpop.f32.mrf.mxu0
        %v242 = vadd.f32 0.0, %v241
        %v243 = vpop.f32.mrf.mxu0
        %v244 = vpop.f32.mrf.mxu0
        %245 = vdwg.mxu0
        %v246 = vlaneseq
        %v247 = vshrl.u32 %v246, 7
        %v248 = vlaneseq
        %v249 = vand.u32 %v248, 127
        %vm250 = vcmp.le.s32.totalorder %v249, %v247
        %v251 = vsel %vm250, 0.0, -inf
        %v252 = vpack.c.bf16 %v240, %v240
        %254 = vrot.lane.b32.xlu0 %v252, 64
        %v255 = vpop.permute.xlu0 %254
        %vm256 = vcmask 130048
        %v258 = vsel %vm256, %v252, 0
        %v261 = vsel %vm256, %v255, 0
        %263 = vmatprep.subr.bf16.mxu0 0
        %264 = vmatpush1.bf16.xpose.msra.mxu0 0
        %265 = vmatprep.subr.bf16.mxu0 0
        %266 = vmatpush1.bf16.xpose.msra.mxu0 0
        %267 = vmatprep.subr.bf16.mxu0 0
        %268 = vmatpush1.bf16.xpose.msra.mxu0 0
        %269 = vmatprep.subr.bf16.mxu0 0
        %270 = vmatpush1.bf16.xpose.msra.mxu0 0
        %271 = vmatprep.subr.bf16.mxu0 0
        %272 = vmatpush1.bf16.xpose.msra.mxu0 0
        %273 = vmatprep.subr.bf16.mxu0 0
        %274 = vmatpush1.bf16.xpose.msra.mxu0 0
        %275 = vmatprep.subr.bf16.mxu0 0
        %276 = vmatpush1.bf16.xpose.msra.mxu0 0
        %277 = vmatprep.subr.bf16.mxu0 0
        %278 = vmatpush1.bf16.xpose.msra.mxu0 %v261
        %279 = vmatprep.subr.bf16.mxu0 0
        %280 = vmatpush2.bf16.xpose.msra.mxu0 0
        %281 = vmatprep.subr.bf16.mxu0 0
        %282 = vmatpush2.bf16.xpose.msra.mxu0 0
        %283 = vmatprep.subr.bf16.mxu0 0
        %284 = vmatpush2.bf16.xpose.msra.mxu0 0
        %285 = vmatprep.subr.bf16.mxu0 0
        %286 = vmatpush2.bf16.xpose.msra.mxu0 0
        %287 = vmatprep.subr.bf16.mxu0 0
        %288 = vmatpush2.bf16.xpose.msra.mxu0 0
        %289 = vmatprep.subr.bf16.mxu0 0
        %290 = vmatpush2.bf16.xpose.msra.mxu0 0
        %291 = vmatprep.subr.bf16.mxu0 0
        %292 = vmatpush2.bf16.xpose.msra.mxu0 0
        %293 = vmatprep.subr.bf16.mxu0 0
        %294 = vmatpush2.bf16.xpose.msra.mxu0 0
        %295 = vmatprep.mubr.bf16.mxu0 0
        %296 = vmatmul.mubr.bf16.gmra.mxu0 %v258
        %v297 = vpop.f32.mrf.mxu0
        %v298 = vadd.f32 %v251, %v297
        %v299 = vpop.f32.mrf.mxu0
        %v300 = vpop.f32.mrf.mxu0
        %v301 = vpop.f32.mrf.mxu0
        %302 = vdwg.mxu0
        %vm303 = vcmask 64512
        %v304 = vsel %vm303, %v298, -inf
        %v305 = vrot.slane %v304, 4
        %v306 = vmax.f32 %v304, %v305
        %v307 = vrot.slane %v306, 2
        %v308 = vmax.f32 %v306, %v307
        %v309 = vrot.slane %v308, 1
        %v310 = vmax.f32 %v308, %v309
        %v311 = vsub.f32 %v298, %v310
        %v312 = vmul.f32 %v311, 1.442695
        %v313 = vpow.pop %v312
        %v314 = vsel %vm303, %v313, 0.0
        %v315 = vrot.slane %v314, 4
        %v316 = vadd.f32 %v314, %v315
        %v317 = vrot.slane %v316, 2
        %v318 = vadd.f32 %v316, %v317
        %v319 = vrot.slane %v318, 1
        %v320 = vadd.f32 %v318, %v319
        %v321 = vrcp.pop %v320
        %v322 = vmul.f32 %v313, %v321
        %v323 = vpack.c.bf16 %v322, %v322
        %v324 = vpack.c.bf16 %v242, %v242
        %v326 = vsel %vm303, %v323, 0
        %vm328 = vcmask 1043456
        %v330 = vsel %vm328, %v324, 0
        %332 = vmatprep.subr.bf16.mxu0 0
        %333 = vmatpush1.bf16.msra.mxu0 0
        %334 = vmatprep.subr.bf16.mxu0 0
        %335 = vmatpush1.bf16.msra.mxu0 0
        %336 = vmatprep.subr.bf16.mxu0 0
        %337 = vmatpush1.bf16.msra.mxu0 0
        %338 = vmatprep.subr.bf16.mxu0 0
        %339 = vmatpush1.bf16.msra.mxu0 0
        %340 = vmatprep.subr.bf16.mxu0 0
        %341 = vmatpush1.bf16.msra.mxu0 0
        %342 = vmatprep.subr.bf16.mxu0 0
        %343 = vmatpush1.bf16.msra.mxu0 0
        %344 = vmatprep.subr.bf16.mxu0 0
        %345 = vmatpush1.bf16.msra.mxu0 0
        %346 = vmatprep.subr.bf16.mxu0 0
        %347 = vmatpush1.bf16.msra.mxu0 %v330
        %348 = vmatprep.subr.bf16.mxu0 0
        %349 = vmatpush2.bf16.msra.mxu0 0
        %350 = vmatprep.subr.bf16.mxu0 0
        %351 = vmatpush2.bf16.msra.mxu0 0
        %352 = vmatprep.subr.bf16.mxu0 0
        %353 = vmatpush2.bf16.msra.mxu0 0
        %354 = vmatprep.subr.bf16.mxu0 0
        %355 = vmatpush2.bf16.msra.mxu0 0
        %356 = vmatprep.subr.bf16.mxu0 0
        %357 = vmatpush2.bf16.msra.mxu0 0
        %358 = vmatprep.subr.bf16.mxu0 0
        %359 = vmatpush2.bf16.msra.mxu0 0
        %360 = vmatprep.subr.bf16.mxu0 0
        %361 = vmatpush2.bf16.msra.mxu0 0
        %362 = vmatprep.subr.bf16.mxu0 0
        %363 = vmatpush2.bf16.msra.mxu0 0
        %364 = vmatprep.mubr.bf16.mxu0 0
        %365 = vmatmul.mubr.bf16.gmra.mxu0 %v326
        %v366 = vpop.f32.mrf.mxu0
        %v367 = vadd.f32 0.0, %v366
        %v368 = vpop.f32.mrf.mxu0
        %v369 = vpop.f32.mrf.mxu0
        %v370 = vpop.f32.mrf.mxu0
        %371 = vdwg.mxu0
        %372 = vst.msk [vmem:[#allocation2] sm:$0xff] %vm256, %v367
        %373 = vrot.lane.b32.xlu0 %v252, 112
        %v374 = vpop.permute.xlu0 %373
        %375 = vrot.lane.b32.xlu0 %v252, 48
        %v376 = vpop.permute.xlu0 %375
        %v378 = vsel %vm256, %v374, 0
        %v381 = vsel %vm256, %v376, 0
        %383 = vmatprep.subr.bf16.mxu0 0
        %384 = vmatpush1.bf16.xpose.msra.mxu0 0
        %385 = vmatprep.subr.bf16.mxu0 0
        %386 = vmatpush1.bf16.xpose.msra.mxu0 0
        %387 = vmatprep.subr.bf16.mxu0 0
        %388 = vmatpush1.bf16.xpose.msra.mxu0 0
        %389 = vmatprep.subr.bf16.mxu0 0
        %390 = vmatpush1.bf16.xpose.msra.mxu0 0
        %391 = vmatprep.subr.bf16.mxu0 0
        %392 = vmatpush1.bf16.xpose.msra.mxu0 0
        %393 = vmatprep.subr.bf16.mxu0 0
        %394 = vmatpush1.bf16.xpose.msra.mxu0 0
        %395 = vmatprep.subr.bf16.mxu0 0
        %396 = vmatpush1.bf16.xpose.msra.mxu0 0
        %397 = vmatprep.subr.bf16.mxu0 0
        %398 = vmatpush1.bf16.xpose.msra.mxu0 %v381
        %399 = vmatprep.subr.bf16.mxu0 0
        %400 = vmatpush2.bf16.xpose.msra.mxu0 0
        %401 = vmatprep.subr.bf16.mxu0 0
        %402 = vmatpush2.bf16.xpose.msra.mxu0 0
        %403 = vmatprep.subr.bf16.mxu0 0
        %404 = vmatpush2.bf16.xpose.msra.mxu0 0
        %405 = vmatprep.subr.bf16.mxu0 0
        %406 = vmatpush2.bf16.xpose.msra.mxu0 0
        %407 = vmatprep.subr.bf16.mxu0 0
        %408 = vmatpush2.bf16.xpose.msra.mxu0 0
        %409 = vmatprep.subr.bf16.mxu0 0
        %410 = vmatpush2.bf16.xpose.msra.mxu0 0
        %411 = vmatprep.subr.bf16.mxu0 0
        %412 = vmatpush2.bf16.xpose.msra.mxu0 0
        %413 = vmatprep.subr.bf16.mxu0 0
        %414 = vmatpush2.bf16.xpose.msra.mxu0 0
        %415 = vmatprep.mubr.bf16.mxu0 0
        %416 = vmatmul.mubr.bf16.gmra.mxu0 %v378
        %v417 = vpop.f32.mrf.mxu0
        %v418 = vadd.f32 %v251, %v417
        %v419 = vpop.f32.mrf.mxu0
        %v420 = vpop.f32.mrf.mxu0
        %v421 = vpop.f32.mrf.mxu0
        %422 = vdwg.mxu0
        %v423 = vsel %vm303, %v418, -inf
        %v424 = vrot.slane %v423, 4
        %v425 = vmax.f32 %v423, %v424
        %v426 = vrot.slane %v425, 2
        %v427 = vmax.f32 %v425, %v426
        %v428 = vrot.slane %v427, 1
        %v429 = vmax.f32 %v427, %v428
        %v430 = vsub.f32 %v418, %v429
        %v431 = vmul.f32 %v430, 1.442695
        %v432 = vpow.pop %v431
        %v433 = vsel %vm303, %v432, 0.0
        %v434 = vrot.slane %v433, 4
        %v435 = vadd.f32 %v433, %v434
        %v436 = vrot.slane %v435, 2
        %v437 = vadd.f32 %v435, %v436
        %v438 = vrot.slane %v437, 1
        %v439 = vadd.f32 %v437, %v438
        %v440 = vrcp.pop %v439
        %v441 = vmul.f32 %v432, %v440
        %v442 = vpack.c.bf16 %v441, %v441
        %444 = vrot.lane.b32.xlu0 %v324, 112
        %v445 = vpop.permute.xlu0 %444
        %v447 = vsel %vm303, %v442, 0
        %v450 = vsel %vm328, %v445, 0
        %452 = vmatprep.subr.bf16.mxu0 0
        %453 = vmatpush1.bf16.msra.mxu0 0
        %454 = vmatprep.subr.bf16.mxu0 0
        %455 = vmatpush1.bf16.msra.mxu0 0
        %456 = vmatprep.subr.bf16.mxu0 0
        %457 = vmatpush1.bf16.msra.mxu0 0
        %458 = vmatprep.subr.bf16.mxu0 0
        %459 = vmatpush1.bf16.msra.mxu0 0
        %460 = vmatprep.subr.bf16.mxu0 0
        %461 = vmatpush1.bf16.msra.mxu0 0
        %462 = vmatprep.subr.bf16.mxu0 0
        %463 = vmatpush1.bf16.msra.mxu0 0
        %464 = vmatprep.subr.bf16.mxu0 0
        %465 = vmatpush1.bf16.msra.mxu0 0
        %466 = vmatprep.subr.bf16.mxu0 0
        %467 = vmatpush1.bf16.msra.mxu0 %v450
        %468 = vmatprep.subr.bf16.mxu0 0
        %469 = vmatpush2.bf16.msra.mxu0 0
        %470 = vmatprep.subr.bf16.mxu0 0
        %471 = vmatpush2.bf16.msra.mxu0 0
        %472 = vmatprep.subr.bf16.mxu0 0
        %473 = vmatpush2.bf16.msra.mxu0 0
        %474 = vmatprep.subr.bf16.mxu0 0
        %475 = vmatpush2.bf16.msra.mxu0 0
        %476 = vmatprep.subr.bf16.mxu0 0
        %477 = vmatpush2.bf16.msra.mxu0 0
        %478 = vmatprep.subr.bf16.mxu0 0
        %479 = vmatpush2.bf16.msra.mxu0 0
        %480 = vmatprep.subr.bf16.mxu0 0
        %481 = vmatpush2.bf16.msra.mxu0 0
        %482 = vmatprep.subr.bf16.mxu0 0
        %483 = vmatpush2.bf16.msra.mxu0 0
        %484 = vmatprep.mubr.bf16.mxu0 0
        %485 = vmatmul.mubr.bf16.gmra.mxu0 %v447
        %v486 = vpop.f32.mrf.mxu0
        %v487 = vadd.f32 0.0, %v486
        %v488 = vpop.f32.mrf.mxu0
        %v489 = vpop.f32.mrf.mxu0
        %v490 = vpop.f32.mrf.mxu0
        %491 = vdwg.mxu0
        %493 = vrot.lane.b32.xlu0 %v487, 16
        %v494 = vpop.permute.xlu0 %493
        %vm496 = vcmask 261248
        %497 = vst.msk [vmem:[#allocation2] sm:$0xff] %vm496, %v494
        %498 = vrot.lane.b32.xlu0 %v252, 96
        %v499 = vpop.permute.xlu0 %498
        %500 = vrot.lane.b32.xlu0 %v252, 32
        %v501 = vpop.permute.xlu0 %500
        %v503 = vsel %vm256, %v499, 0
        %v506 = vsel %vm256, %v501, 0
        %508 = vmatprep.subr.bf16.mxu0 0
        %509 = vmatpush1.bf16.xpose.msra.mxu0 0
        %510 = vmatprep.subr.bf16.mxu0 0
        %511 = vmatpush1.bf16.xpose.msra.mxu0 0
        %512 = vmatprep.subr.bf16.mxu0 0
        %513 = vmatpush1.bf16.xpose.msra.mxu0 0
        %514 = vmatprep.subr.bf16.mxu0 0
        %515 = vmatpush1.bf16.xpose.msra.mxu0 0
        %516 = vmatprep.subr.bf16.mxu0 0
        %517 = vmatpush1.bf16.xpose.msra.mxu0 0
        %518 = vmatprep.subr.bf16.mxu0 0
        %519 = vmatpush1.bf16.xpose.msra.mxu0 0
        %520 = vmatprep.subr.bf16.mxu0 0
        %521 = vmatpush1.bf16.xpose.msra.mxu0 0
        %522 = vmatprep.subr.bf16.mxu0 0
        %523 = vmatpush1.bf16.xpose.msra.mxu0 %v506
        %524 = vmatprep.subr.bf16.mxu0 0
        %525 = vmatpush2.bf16.xpose.msra.mxu0 0
        %526 = vmatprep.subr.bf16.mxu0 0
        %527 = vmatpush2.bf16.xpose.msra.mxu0 0
        %528 = vmatprep.subr.bf16.mxu0 0
        %529 = vmatpush2.bf16.xpose.msra.mxu0 0
        %530 = vmatprep.subr.bf16.mxu0 0
        %531 = vmatpush2.bf16.xpose.msra.mxu0 0
        %532 = vmatprep.subr.bf16.mxu0 0
        %533 = vmatpush2.bf16.xpose.msra.mxu0 0
        %534 = vmatprep.subr.bf16.mxu0 0
        %535 = vmatpush2.bf16.xpose.msra.mxu0 0
        %536 = vmatprep.subr.bf16.mxu0 0
        %537 = vmatpush2.bf16.xpose.msra.mxu0 0
        %538 = vmatprep.subr.bf16.mxu0 0
        %539 = vmatpush2.bf16.xpose.msra.mxu0 0
        %540 = vmatprep.mubr.bf16.mxu0 0
        %541 = vmatmul.mubr.bf16.gmra.mxu0 %v503
        %v542 = vpop.f32.mrf.mxu0
        %v543 = vadd.f32 %v251, %v542
        %v544 = vpop.f32.mrf.mxu0
        %v545 = vpop.f32.mrf.mxu0
        %v546 = vpop.f32.mrf.mxu0
        %547 = vdwg.mxu0
        %v548 = vsel %vm303, %v543, -inf
        %v549 = vrot.slane %v548, 4
        %v550 = vmax.f32 %v548, %v549
        %v551 = vrot.slane %v550, 2
        %v552 = vmax.f32 %v550, %v551
        %v553 = vrot.slane %v552, 1
        %v554 = vmax.f32 %v552, %v553
        %v555 = vsub.f32 %v543, %v554
        %v556 = vmul.f32 %v555, 1.442695
        %v557 = vpow.pop %v556
        %v558 = vsel %vm303, %v557, 0.0
        %v559 = vrot.slane %v558, 4
        %v560 = vadd.f32 %v558, %v559
        %v561 = vrot.slane %v560, 2
        %v562 = vadd.f32 %v560, %v561
        %v563 = vrot.slane %v562, 1
        %v564 = vadd.f32 %v562, %v563
        %v565 = vrcp.pop %v564
        %v566 = vmul.f32 %v557, %v565
        %v567 = vpack.c.bf16 %v566, %v566
        %568 = vrot.lane.b32.xlu0 %v324, 96
        %v569 = vpop.permute.xlu0 %568
        %v571 = vsel %vm303, %v567, 0
        %v574 = vsel %vm328, %v569, 0
        %576 = vmatprep.subr.bf16.mxu0 0
        %577 = vmatpush1.bf16.msra.mxu0 0
        %578 = vmatprep.subr.bf16.mxu0 0
        %579 = vmatpush1.bf16.msra.mxu0 0
        %580 = vmatprep.subr.bf16.mxu0 0
        %581 = vmatpush1.bf16.msra.mxu0 0
        %582 = vmatprep.subr.bf16.mxu0 0
        %583 = vmatpush1.bf16.msra.mxu0 0
        %584 = vmatprep.subr.bf16.mxu0 0
        %585 = vmatpush1.bf16.msra.mxu0 0
        %586 = vmatprep.subr.bf16.mxu0 0
        %587 = vmatpush1.bf16.msra.mxu0 0
        %588 = vmatprep.subr.bf16.mxu0 0
        %589 = vmatpush1.bf16.msra.mxu0 0
        %590 = vmatprep.subr.bf16.mxu0 0
        %591 = vmatpush1.bf16.msra.mxu0 %v574
        %592 = vmatprep.subr.bf16.mxu0 0
        %593 = vmatpush2.bf16.msra.mxu0 0
        %594 = vmatprep.subr.bf16.mxu0 0
        %595 = vmatpush2.bf16.msra.mxu0 0
        %596 = vmatprep.subr.bf16.mxu0 0
        %597 = vmatpush2.bf16.msra.mxu0 0
        %598 = vmatprep.subr.bf16.mxu0 0
        %599 = vmatpush2.bf16.msra.mxu0 0
        %600 = vmatprep.subr.bf16.mxu0 0
        %601 = vmatpush2.bf16.msra.mxu0 0
        %602 = vmatprep.subr.bf16.mxu0 0
        %603 = vmatpush2.bf16.msra.mxu0 0
        %604 = vmatprep.subr.bf16.mxu0 0
        %605 = vmatpush2.bf16.msra.mxu0 0
        %606 = vmatprep.subr.bf16.mxu0 0
        %607 = vmatpush2.bf16.msra.mxu0 0
        %608 = vmatprep.mubr.bf16.mxu0 0
        %609 = vmatmul.mubr.bf16.gmra.mxu0 %v571
        %v610 = vpop.f32.mrf.mxu0
        %v611 = vadd.f32 0.0, %v610
        %v612 = vpop.f32.mrf.mxu0
        %v613 = vpop.f32.mrf.mxu0
        %v614 = vpop.f32.mrf.mxu0
        %615 = vdwg.mxu0
        %617 = vrot.lane.b32.xlu0 %v611, 32
        %v618 = vpop.permute.xlu0 %617
        %vm620 = vcmask 392448
        %621 = vst.msk [vmem:[#allocation2] sm:$0xff] %vm620, %v618
        %622 = vrot.lane.b32.xlu0 %v252, 80
        %v623 = vpop.permute.xlu0 %622
        %624 = vrot.lane.b32.xlu0 %v252, 16
        %v625 = vpop.permute.xlu0 %624
        %v627 = vsel %vm256, %v623, 0
        %v630 = vsel %vm256, %v625, 0
        %632 = vmatprep.subr.bf16.mxu0 0
        %633 = vmatpush1.bf16.xpose.msra.mxu0 0
        %634 = vmatprep.subr.bf16.mxu0 0
        %635 = vmatpush1.bf16.xpose.msra.mxu0 0
        %636 = vmatprep.subr.bf16.mxu0 0
        %637 = vmatpush1.bf16.xpose.msra.mxu0 0
        %638 = vmatprep.subr.bf16.mxu0 0
        %639 = vmatpush1.bf16.xpose.msra.mxu0 0
        %640 = vmatprep.subr.bf16.mxu0 0
        %641 = vmatpush1.bf16.xpose.msra.mxu0 0
        %642 = vmatprep.subr.bf16.mxu0 0
        %643 = vmatpush1.bf16.xpose.msra.mxu0 0
        %644 = vmatprep.subr.bf16.mxu0 0
        %645 = vmatpush1.bf16.xpose.msra.mxu0 0
        %646 = vmatprep.subr.bf16.mxu0 0
        %647 = vmatpush1.bf16.xpose.msra.mxu0 %v630
        %648 = vmatprep.subr.bf16.mxu0 0
        %649 = vmatpush2.bf16.xpose.msra.mxu0 0
        %650 = vmatprep.subr.bf16.mxu0 0
        %651 = vmatpush2.bf16.xpose.msra.mxu0 0
        %652 = vmatprep.subr.bf16.mxu0 0
        %653 = vmatpush2.bf16.xpose.msra.mxu0 0
        %654 = vmatprep.subr.bf16.mxu0 0
        %655 = vmatpush2.bf16.xpose.msra.mxu0 0
        %656 = vmatprep.subr.bf16.mxu0 0
        %657 = vmatpush2.bf16.xpose.msra.mxu0 0
        %658 = vmatprep.subr.bf16.mxu0 0
        %659 = vmatpush2.bf16.xpose.msra.mxu0 0
        %660 = vmatprep.subr.bf16.mxu0 0
        %661 = vmatpush2.bf16.xpose.msra.mxu0 0
        %662 = vmatprep.subr.bf16.mxu0 0
        %663 = vmatpush2.bf16.xpose.msra.mxu0 0
        %664 = vmatprep.mubr.bf16.mxu0 0
        %665 = vmatmul.mubr.bf16.gmra.mxu0 %v627
        %v666 = vpop.f32.mrf.mxu0
        %v667 = vadd.f32 %v251, %v666
        %v668 = vpop.f32.mrf.mxu0
        %v669 = vpop.f32.mrf.mxu0
        %v670 = vpop.f32.mrf.mxu0
        %671 = vdwg.mxu0
        %v672 = vsel %vm303, %v667, -inf
        %v673 = vrot.slane %v672, 4
        %v674 = vmax.f32 %v672, %v673
        %v675 = vrot.slane %v674, 2
        %v676 = vmax.f32 %v674, %v675
        %v677 = vrot.slane %v676, 1
        %v678 = vmax.f32 %v676, %v677
        %v679 = vsub.f32 %v667, %v678
        %v680 = vmul.f32 %v679, 1.442695
        %v681 = vpow.pop %v680
        %v682 = vsel %vm303, %v681, 0.0
        %v683 = vrot.slane %v682, 4
        %v684 = vadd.f32 %v682, %v683
        %v685 = vrot.slane %v684, 2
        %v686 = vadd.f32 %v684, %v685
        %v687 = vrot.slane %v686, 1
        %v688 = vadd.f32 %v686, %v687
        %v689 = vrcp.pop %v688
        %v690 = vmul.f32 %v681, %v689
        %v691 = vpack.c.bf16 %v690, %v690
        %692 = vrot.lane.b32.xlu0 %v324, 80
        %v693 = vpop.permute.xlu0 %692
        %v695 = vsel %vm303, %v691, 0
        %v698 = vsel %vm328, %v693, 0
        %700 = vmatprep.subr.bf16.mxu0 0
        %701 = vmatpush1.bf16.msra.mxu0 0
        %702 = vmatprep.subr.bf16.mxu0 0
        %703 = vmatpush1.bf16.msra.mxu0 0
        %704 = vmatprep.subr.bf16.mxu0 0
        %705 = vmatpush1.bf16.msra.mxu0 0
        %706 = vmatprep.subr.bf16.mxu0 0
        %707 = vmatpush1.bf16.msra.mxu0 0
        %708 = vmatprep.subr.bf16.mxu0 0
        %709 = vmatpush1.bf16.msra.mxu0 0
        %710 = vmatprep.subr.bf16.mxu0 0
        %711 = vmatpush1.bf16.msra.mxu0 0
        %712 = vmatprep.subr.bf16.mxu0 0
        %713 = vmatpush1.bf16.msra.mxu0 0
        %714 = vmatprep.subr.bf16.mxu0 0
        %715 = vmatpush1.bf16.msra.mxu0 %v698
        %716 = vmatprep.subr.bf16.mxu0 0
        %717 = vmatpush2.bf16.msra.mxu0 0
        %718 = vmatprep.subr.bf16.mxu0 0
        %719 = vmatpush2.bf16.msra.mxu0 0
        %720 = vmatprep.subr.bf16.mxu0 0
        %721 = vmatpush2.bf16.msra.mxu0 0
        %722 = vmatprep.subr.bf16.mxu0 0
        %723 = vmatpush2.bf16.msra.mxu0 0
        %724 = vmatprep.subr.bf16.mxu0 0
        %725 = vmatpush2.bf16.msra.mxu0 0
        %726 = vmatprep.subr.bf16.mxu0 0
        %727 = vmatpush2.bf16.msra.mxu0 0
        %728 = vmatprep.subr.bf16.mxu0 0
        %729 = vmatpush2.bf16.msra.mxu0 0
        %730 = vmatprep.subr.bf16.mxu0 0
        %731 = vmatpush2.bf16.msra.mxu0 0
        %732 = vmatprep.mubr.bf16.mxu0 0
        %733 = vmatmul.mubr.bf16.gmra.mxu0 %v695
        %v734 = vpop.f32.mrf.mxu0
        %v735 = vadd.f32 0.0, %v734
        %v736 = vpop.f32.mrf.mxu0
        %v737 = vpop.f32.mrf.mxu0
        %v738 = vpop.f32.mrf.mxu0
        %739 = vdwg.mxu0
        %741 = vrot.lane.b32.xlu0 %v735, 48
        %v742 = vpop.permute.xlu0 %741
        %vm744 = vcmask 523648
        %745 = vst.msk [vmem:[#allocation2] sm:$0xff] %vm744, %v742
        %v746 = vld [vmem:[#allocation2] sm:$0xff]
        %vm747 = vcmask 523264
        %748 = vst.msk [vmem:[%s173] sm:$0xff] %vm747, %v746
        %s749 = sand.u32 %s75, 1
        %s750 = scalar_lea.sflag [#allocation5], %s749
        %s751 = sand.u32 %s75, 1
        %s752 = smul.addr %s751, 8
        %s753 = scalar_lea.vmem [#allocation8], %s752
        // Predicated region
        $region37: #{tpu_custom_call.1} parent=27 // pred_check
          %p754 = pneg %p85
        $region38: #{tpu_custom_call.1} parent=27 // pred_check_branch
          %756 = sbr.rel (%p754) target = $region40
        $region39: #{tpu_custom_call.1} parent=27 // pred_region
          %s758 = ssub.s32 128, 128
          %759 = vsyncadd %s750, %s758
          %s760 = smul.addr %s20, 128
          %s761 = scalar_lea.hbm %s2, %s760
          %s763 = sshll.u32 %s753, 4
          %s764 = int_to_ptr.vmem [resolvable:$true] %s763
          %766 = dma.vmem_to_hbm [thread:$0]  %s764, 128, %s761, %s750
        $region40: #{tpu_custom_call.1} parent=27 // pred_fallthru
          _
      $region28: #{tpu_custom_call.1} parent=5 // pred_fallthru
        _
      %p767 = scmp.le.s32.totalorder 2, %s15
      // Predicated region
      $region41: #{tpu_custom_call.1} parent=5 // pred_check
        %p768 = pneg %p767
      $region42: #{tpu_custom_call.1} parent=5 // pred_check_branch
        %770 = sbr.rel (%p768) target = $region44
      $region43: #{tpu_custom_call.1} parent=5 // pred_region
        %s771 = ssub.s32 %s15, 2
        // Predicated region
        $region45: #{tpu_custom_call.1} parent=43 // pred_check
          %p772 = pneg %p91
        $region46: #{tpu_custom_call.1} parent=43 // pred_check_branch
          %774 = sbr.rel (%p772) target = $region48
        $region47: #{tpu_custom_call.1} parent=43 // pred_region
          %s775 = sand.u32 %s76, 1
          %s776 = scalar_lea.sflag [#allocation5], %s775
          %s777 = sand.u32 %s76, 1
          %s778 = smul.addr %s777, 8
          %s779 = scalar_lea.vmem [#allocation8], %s778
          %780 = dma.done %s776, 128
        $region48: #{tpu_custom_call.1} parent=43 // pred_fallthru
          _
      $region44: #{tpu_custom_call.1} parent=5 // pred_fallthru
        _
    $region6: #{tpu_custom_call.1} parent=1 // loop_footer
      %s19 = sadd.s32 1, %s15
    $region7: #{tpu_custom_call.1} parent=1 // loop_footer_branch
      %14 = sbr.rel target = $region3
    $region8: #{tpu_custom_call.1} parent=1 // loop_exit
      _
    %781 = vsyncpa [#allocation4], 1
    %s782 = scalar_lea.sflag [#allocation4], 1
    %783 = vsyncpa %s782, 1
    %784 = vsyncpa [#allocation7], 1
    %785 = vsyncpa [#allocation5], 1
    %s786 = scalar_lea.sflag [#allocation5], 1
    %787 = vsyncpa %s786, 1

</llo_original>
